<compile_context>
chip_gen: v7x
topology: tpu7x:2x2x1
jax: 0.10.0
libtpu: 0.0.40
codegen_flags: <defaults>
</compile_context>

<pallas_src>
import functools
import math

import jax
import jax.numpy as jnp
from jax.experimental import pallas as pl
from jax.experimental.pallas import tpu as pltpu

# -log of the off-class clamped one-hot value (clip(one_hot, 1e-4, 1.0)).
_NEG_LOG_LABEL_EPS = -math.log(1e-4)


def _sce_kernel(pred_ref, tgt_ref, out_ref, *, alpha, beta, n_rows, tile_n,
                tiles_per_core):
    # pred_ref: (C, TN) logits (samples on the lane axis), any float dtype.
    # tgt_ref : (1, TN) int32 labels.
    # out_ref : (1, 1, TN) f32 per-core, per-lane partial-loss accumulator.
    core = pl.program_id(0)
    step = pl.program_id(1)

    @pl.when(step == 0)
    def _init():
        out_ref[...] = jnp.zeros_like(out_ref)

    tile_idx = core * tiles_per_core + step
    tile_start = tile_idx * tile_n

    # Skip all compute on fully out-of-range tiles (the clamped duplicate tile
    # that appears when the tile count is odd with the 2-core split).
    @pl.when(tile_start < n_rows)
    def _compute():
        logits = pred_ref[...].astype(jnp.float32)          # (C, TN)
        tgt = tgt_ref[...]                                  # (1, TN) int32
        C, TN = logits.shape

        class_ids = jax.lax.broadcasted_iota(jnp.int32, (C, TN), 0)
        onehot = class_ids == tgt                           # (C, TN) bool

        # --- standard cross entropy (numerically stable), per sample == per lane ---
        m = jnp.max(logits, axis=0, keepdims=True)          # (1, TN)
        shifted = logits - m                                # (C, TN)
        exp_s = jnp.exp(shifted)                            # (C, TN)
        sumexp = jnp.sum(exp_s, axis=0, keepdims=True)      # (1, TN)
        log_z = jnp.log(sumexp)                             # (1, TN)
        # TODO(synk): torch's CrossEntropyLoss raises on out-of-range labels;
        # here invalid labels fall through silently (onehot all-false).
        shifted_tgt = jnp.sum(jnp.where(onehot, shifted, 0.0), axis=0,
                              keepdims=True)                # (1, TN)
        ce_rows = log_z - shifted_tgt                       # (1, TN)

        # --- reverse cross entropy, fused ---
        #   rce = -sum_c clip(p)_c * log(clip(onehot)_c)
        #       = -log(1e-4) * (sum_c clip(p)_c - clip(p)_target)
        # p_target is recovered from shifted_tgt (no extra masked reduction).
        # (upper clip at 1.0 never binds for a softmax; approx=False keeps parity)
        inv_z = pl.reciprocal(sumexp, approx=False)         # (1, TN)
        probs = jnp.maximum(exp_s * inv_z, 1e-7)            # (C, TN)
        sum_p = jnp.sum(probs, axis=0, keepdims=True)       # (1, TN)
        p_tgt = jnp.maximum(jnp.exp(shifted_tgt) * inv_z, 1e-7)
        rce_rows = jnp.float32(_NEG_LOG_LABEL_EPS) * (sum_p - p_tgt)

        row_loss = alpha * ce_rows + beta * rce_rows        # (1, TN)

        is_full = (tile_start + tile_n) <= n_rows

        # Interior (full) tiles: pure VPU accumulate, no mask work.
        @pl.when(is_full)
        def _acc_full():
            out_ref[...] += row_loss.reshape(out_ref.shape)

        # Single partial tail tile: mask the out-of-range lanes.
        @pl.when(jnp.logical_not(is_full))
        def _acc_tail():
            lane = jax.lax.broadcasted_iota(jnp.int32, (1, TN), 1)
            masked = jnp.where(lane < (n_rows - tile_start), row_loss, 0.0)
            out_ref[...] += masked.reshape(out_ref.shape)


def sce_loss(pred, target, *, alpha=0.1, beta=1.0, num_classes=10,
             tile_n=32768, class_major=False):
    """Pallas implementation of SCELoss.forward.

    pred   : (N, C) logits (module convention), or (C, N) if class_major=True
             (avoids the wrapper-side HBM transpose -- the fast path).
    target : (N,) integer labels.
    tile_n : samples per grid step; must be a multiple of 128 when N > tile_n.
    """
    if class_major:
        C, N = pred.shape
    else:
        N, C = pred.shape
    assert C == num_classes

    # Lane-dense layout: classes on sublanes, samples on the 128-lane axis.
    pred_cn = pred if class_major else pred.T               # (C, N)
    tgt_row = target.astype(jnp.int32).reshape(1, N)        # (1, N)

    # Tile size: single full block for small N (sidesteps the /128 constraint),
    # otherwise a 128-multiple tile with in-kernel tail masking.
    tn = N if N <= tile_n else tile_n
    assert tn == N or tn % 128 == 0, "tile_n must be a multiple of 128"

    total_tiles = pl.cdiv(N, tn)
    num_cores = min(2, total_tiles)          # v7x: split batch across both TCs
    tiles_per_core = pl.cdiv(total_tiles, num_cores)

    def in_map(c, i):
        # Clamp out-of-range tiles (odd tile count on 2 cores); the kernel skips
        # them entirely via pl.when.
        t = jnp.minimum(c * tiles_per_core + i, total_tiles - 1)
        return (0, t)

    kernel = functools.partial(
        _sce_kernel, alpha=float(alpha), beta=float(beta),
        n_rows=N, tile_n=tn, tiles_per_core=tiles_per_core)

    partials = pl.pallas_call(
        kernel,
        out_shape=jax.ShapeDtypeStruct((num_cores, 1, tn), jnp.float32),
        grid_spec=pltpu.PrefetchScalarGridSpec(
            num_scalar_prefetch=0,
            grid=(num_cores, tiles_per_core),
            in_specs=[
                pl.BlockSpec((C, tn), in_map),
                pl.BlockSpec((1, tn), in_map),
            ],
            out_specs=pl.BlockSpec((1, 1, tn), lambda c, i: (c, 0, 0)),
        ),
        compiler_params=pltpu.CompilerParams(
            dimension_semantics=("parallel", "arbitrary")),
        cost_estimate=pl.CostEstimate(
            flops=14 * N * C,
            transcendentals=N * (C + 3),
            bytes_accessed=N * C * pred.dtype.itemsize + N * 4
                           + num_cores * tn * 4),
    )(pred_cn, tgt_row)

    # Each core's (1, 1, tn) block holds per-lane partial sums; finish in XLA.
    return jnp.sum(partials) * (1.0 / N)


def _sce_loss_ref(pred, target, *, alpha=0.1, beta=1.0, num_classes=10):
    """Pure-JAX reference mirroring the PyTorch module."""
    logp = jax.nn.log_softmax(pred.astype(jnp.float32), axis=1)
    ce = -jnp.mean(jnp.take_along_axis(logp, target[:, None].astype(jnp.int32), axis=1))
    probs = jnp.clip(jax.nn.softmax(pred.astype(jnp.float32), axis=1), 1e-7, 1.0)
    onehot = jnp.clip(jax.nn.one_hot(target, num_classes, dtype=jnp.float32), 1e-4, 1.0)
    rce = -jnp.sum(probs * jnp.log(onehot), axis=1)
    return alpha * ce + beta * jnp.mean(rce)


if __name__ == "__main__":
    key = jax.random.PRNGKey(0)
    k1, k2 = jax.random.split(key)
    C = 10

    # Small single-block case (matches the module's (N, num_classes=10) convention).
    N = 8
    pred = jax.random.normal(k1, (N, C), dtype=jnp.float32) * 2.0
    target = jax.random.randint(k2, (N,), 0, C, dtype=jnp.int32)
    loss = jax.block_until_ready(sce_loss(pred, target, alpha=0.1, beta=1.0, num_classes=C))
    ref = jax.block_until_ready(_sce_loss_ref(pred, target, alpha=0.1, beta=1.0, num_classes=C))
    assert jnp.allclose(loss, ref, rtol=1e-5, atol=1e-5), (loss, ref)

    # Tiled path: small tile forces grid=(2 cores, 2 tiles/core) with a masked
    # partial tail tile and one clamped (skipped) tile.
    N2 = 300
    k3, k4 = jax.random.split(k1)
    pred2 = jax.random.normal(k3, (N2, C), dtype=jnp.float32) * 2.0
    target2 = jax.random.randint(k4, (N2,), 0, C, dtype=jnp.int32)
    loss2 = jax.block_until_ready(
        sce_loss(pred2, target2, alpha=0.1, beta=1.0, num_classes=C, tile_n=128))
    ref2 = jax.block_until_ready(_sce_loss_ref(pred2, target2, alpha=0.1, beta=1.0, num_classes=C))
    assert jnp.allclose(loss2, ref2, rtol=1e-5, atol=1e-5), (loss2, ref2)

    # Class-major fast path (no wrapper HBM transpose).
    pred2_cm = jnp.asarray(pred2.T)
    loss3 = jax.block_until_ready(
        sce_loss(pred2_cm, target2, alpha=0.1, beta=1.0, num_classes=C,
                 tile_n=128, class_major=True))
    assert jnp.allclose(loss3, ref2, rtol=1e-5, atol=1e-5), (loss3, ref2)

    print("KERNEL_OK")
</pallas_src>

<mosaic_0001>
module attributes {stable_mosaic.version = 11 : i64} {
  func.func @_sce_kernel(%arg0: i32, %arg1: i32, %arg2: memref<10x8xf32, #tpu.memory_space<vmem>>, %arg3: memref<1x8xi32, #tpu.memory_space<vmem>>, %arg4: memref<1x1x8xf32, #tpu.memory_space<vmem>>) attributes {dimension_semantics = [#tpu.dimension_semantics<parallel>, #tpu.dimension_semantics<arbitrary>], iteration_bounds = array<i64: 1, 1>, scalar_prefetch = 0 : i64, scratch_operands = 0 : i64, tpu.core_type = #tpu.core_type<tc>, window_params = [{transform_indices = @transform_0, window_bounds = array<i64: 10, 8>}, {transform_indices = @transform_1, window_bounds = array<i64: 1, 8>}, {transform_indices = @transform_2, window_bounds = array<i64: 1, 1, 8>}]} {
    %c0_i32 = arith.constant 0 : i32
    %0 = arith.cmpi eq, %arg1, %c0_i32 : i32
    %1 = arith.extui %0 : i1 to i32
    %c0_i32_0 = arith.constant 0 : i32
    %2 = arith.cmpi ne, %1, %c0_i32_0 : i32
    scf.if %2 {
      %cst = arith.constant 0.000000e+00 : f32
      %9 = vector.broadcast %cst : f32 to vector<1x1x8xf32>
      %c0 = arith.constant 0 : index
      %c0_3 = arith.constant 0 : index
      %c0_4 = arith.constant 0 : index
      %10 = vector.load %arg4[%c0, %c0_3, %c0_4] : memref<1x1x8xf32, #tpu.memory_space<vmem>>, vector<1x1x8xf32>
      tpu.vector_store %arg4[%c0, %c0_3, %c0_4], %9 {strides = array<i32>} : memref<1x1x8xf32, #tpu.memory_space<vmem>>, vector<1x1x8xf32>,
    } else {
    }
    %c1_i32 = arith.constant 1 : i32
    %3 = arith.muli %arg0, %c1_i32 : i32
    %4 = arith.addi %3, %arg1 : i32
    %c8_i32 = arith.constant 8 : i32
    %5 = arith.muli %4, %c8_i32 : i32
    %c8_i32_1 = arith.constant 8 : i32
    %6 = arith.cmpi slt, %5, %c8_i32_1 : i32
    %7 = arith.extui %6 : i1 to i32
    %c0_i32_2 = arith.constant 0 : i32
    %8 = arith.cmpi ne, %7, %c0_i32_2 : i32
    scf.if %8 {
      %c0 = arith.constant 0 : index
      %c0_3 = arith.constant 0 : index
      %9 = vector.load %arg2[%c0, %c0_3] : memref<10x8xf32, #tpu.memory_space<vmem>>, vector<10x8xf32>
      %c0_4 = arith.constant 0 : index
      %c0_5 = arith.constant 0 : index
      %10 = vector.load %arg3[%c0_4, %c0_5] : memref<1x8xi32, #tpu.memory_space<vmem>>, vector<1x8xi32>
      %11 = tpu.iota {dimensions = array<i32: 0>} : vector<10x8xi32>
      %12 = vector.broadcast %10 : vector<1x8xi32> to vector<10x8xi32>
      %13 = arith.cmpi eq, %11, %12 : vector<10x8xi32>
      %cst = arith.constant dense<0xFF800000> : vector<8xf32>
      %14 = vector.multi_reduction <maximumf>, %9, %cst [0] : vector<10x8xf32> to vector<8xf32>
      %15 = vector.shape_cast %14 : vector<8xf32> to vector<1x8xf32>
      %16 = vector.broadcast %15 : vector<1x8xf32> to vector<10x8xf32>
      %17 = arith.subf %9, %16 : vector<10x8xf32>
      %18 = math.exp %17 : vector<10x8xf32>
      %cst_6 = arith.constant dense<0.000000e+00> : vector<8xf32>
      %19 = vector.multi_reduction <add>, %18, %cst_6 [0] : vector<10x8xf32> to vector<8xf32>
      %20 = vector.shape_cast %19 : vector<8xf32> to vector<1x8xf32>
      %21 = math.log %20 : vector<1x8xf32>
      %cst_7 = arith.constant 0.000000e+00 : f32
      %22 = vector.broadcast %cst_7 : f32 to vector<10x8xf32>
      %23 = arith.select %13, %17, %22 : vector<10x8xi1>, vector<10x8xf32>
      %cst_8 = arith.constant dense<0.000000e+00> : vector<8xf32>
      %24 = vector.multi_reduction <add>, %23, %cst_8 [0] : vector<10x8xf32> to vector<8xf32>
      %25 = vector.shape_cast %24 : vector<8xf32> to vector<1x8xf32>
      %26 = arith.subf %21, %25 : vector<1x8xf32>
      %27 = tpu.reciprocal %20 : vector<1x8xf32> -> vector<1x8xf32>
      %28 = vector.broadcast %27 : vector<1x8xf32> to vector<10x8xf32>
      %29 = arith.mulf %18, %28 : vector<10x8xf32>
      %cst_9 = arith.constant 1.000000e-07 : f32
      %30 = vector.broadcast %cst_9 : f32 to vector<10x8xf32>
      %31 = arith.maximumf %29, %30 : vector<10x8xf32>
      %cst_10 = arith.constant dense<0.000000e+00> : vector<8xf32>
      %32 = vector.multi_reduction <add>, %31, %cst_10 [0] : vector<10x8xf32> to vector<8xf32>
      %33 = vector.shape_cast %32 : vector<8xf32> to vector<1x8xf32>
      %34 = math.exp %25 : vector<1x8xf32>
      %35 = arith.mulf %34, %27 : vector<1x8xf32>
      %cst_11 = arith.constant 1.000000e-07 : f32
      %36 = vector.broadcast %cst_11 : f32 to vector<1x8xf32>
      %37 = arith.maximumf %35, %36 : vector<1x8xf32>
      %38 = arith.subf %33, %37 : vector<1x8xf32>
      %cst_12 = arith.constant 9.21034049 : f32
      %39 = vector.broadcast %cst_12 : f32 to vector<1x8xf32>
      %40 = arith.mulf %39, %38 : vector<1x8xf32>
      %cst_13 = arith.constant 1.000000e-01 : f32
      %41 = vector.broadcast %cst_13 : f32 to vector<1x8xf32>
      %42 = arith.mulf %41, %26 : vector<1x8xf32>
      %cst_14 = arith.constant 1.000000e+00 : f32
      %43 = vector.broadcast %cst_14 : f32 to vector<1x8xf32>
      %44 = arith.mulf %43, %40 : vector<1x8xf32>
      %45 = arith.addf %42, %44 : vector<1x8xf32>
      %c8_i32_15 = arith.constant 8 : i32
      %46 = arith.addi %5, %c8_i32_15 : i32
      %c8_i32_16 = arith.constant 8 : i32
      %47 = arith.cmpi sle, %46, %c8_i32_16 : i32
      %48 = arith.extui %47 : i1 to i32
      %c0_i32_17 = arith.constant 0 : i32
      %49 = arith.cmpi ne, %48, %c0_i32_17 : i32
      scf.if %49 {
        %c0_19 = arith.constant 0 : index
        %c0_20 = arith.constant 0 : index
        %c0_21 = arith.constant 0 : index
        %53 = vector.load %arg4[%c0_19, %c0_20, %c0_21] : memref<1x1x8xf32, #tpu.memory_space<vmem>>, vector<1x1x8xf32>
        %54 = vector.shape_cast %45 : vector<1x8xf32> to vector<1x1x8xf32>
        %55 = arith.addf %53, %54 : vector<1x1x8xf32>
        %c0_22 = arith.constant 0 : index
        %c0_23 = arith.constant 0 : index
        %c0_24 = arith.constant 0 : index
        %56 = vector.load %arg4[%c0_22, %c0_23, %c0_24] : memref<1x1x8xf32, #tpu.memory_space<vmem>>, vector<1x1x8xf32>
        tpu.vector_store %arg4[%c0_22, %c0_23, %c0_24], %55 {strides = array<i32>} : memref<1x1x8xf32, #tpu.memory_space<vmem>>, vector<1x1x8xf32>,
      } else {
      }
      %true = arith.constant true
      %50 = arith.xori %47, %true : i1
      %51 = arith.extui %50 : i1 to i32
      %c0_i32_18 = arith.constant 0 : i32
      %52 = arith.cmpi ne, %51, %c0_i32_18 : i32
      scf.if %52 {
        %53 = tpu.iota {dimensions = array<i32: 1>} : vector<1x8xi32>
        %c8_i32_19 = arith.constant 8 : i32
        %54 = arith.subi %c8_i32_19, %5 : i32
        %55 = vector.broadcast %54 : i32 to vector<1x8xi32>
        %56 = arith.cmpi slt, %53, %55 : vector<1x8xi32>
        %cst_20 = arith.constant 0.000000e+00 : f32
        %57 = vector.broadcast %cst_20 : f32 to vector<1x8xf32>
        %58 = arith.select %56, %45, %57 : vector<1x8xi1>, vector<1x8xf32>
        %c0_21 = arith.constant 0 : index
        %c0_22 = arith.constant 0 : index
        %c0_23 = arith.constant 0 : index
        %59 = vector.load %arg4[%c0_21, %c0_22, %c0_23] : memref<1x1x8xf32, #tpu.memory_space<vmem>>, vector<1x1x8xf32>
        %60 = vector.shape_cast %58 : vector<1x8xf32> to vector<1x1x8xf32>
        %61 = arith.addf %59, %60 : vector<1x1x8xf32>
        %c0_24 = arith.constant 0 : index
        %c0_25 = arith.constant 0 : index
        %c0_26 = arith.constant 0 : index
        %62 = vector.load %arg4[%c0_24, %c0_25, %c0_26] : memref<1x1x8xf32, #tpu.memory_space<vmem>>, vector<1x1x8xf32>
        tpu.vector_store %arg4[%c0_24, %c0_25, %c0_26], %61 {strides = array<i32>} : memref<1x1x8xf32, #tpu.memory_space<vmem>>, vector<1x1x8xf32>,
      } else {
      }
    } else {
    }
    return
  }
  func.func @transform_0(%arg0: i32, %arg1: i32) -> (i32, i32) {
    %c1_i32 = arith.constant 1 : i32
    %0 = arith.muli %arg0, %c1_i32 : i32
    %1 = arith.addi %0, %arg1 : i32
    %c0_i32 = arith.constant 0 : i32
    %2 = arith.minsi %1, %c0_i32 : i32
    %c0_i32_0 = arith.constant 0 : i32
    %c0_i32_1 = arith.constant 0 : i32
    return %c0_i32_0, %2 : i32, i32
  }
  func.func @transform_1(%arg0: i32, %arg1: i32) -> (i32, i32) {
    %c1_i32 = arith.constant 1 : i32
    %0 = arith.muli %arg0, %c1_i32 : i32
    %1 = arith.addi %0, %arg1 : i32
    %c0_i32 = arith.constant 0 : i32
    %2 = arith.minsi %1, %c0_i32 : i32
    %c0_i32_0 = arith.constant 0 : i32
    %c0_i32_1 = arith.constant 0 : i32
    return %c0_i32_0, %2 : i32, i32
  }
  func.func @transform_2(%arg0: i32, %arg1: i32) -> (i32, i32, i32) {
    %c0_i32 = arith.constant 0 : i32
    %c0_i32_0 = arith.constant 0 : i32
    %c0_i32_1 = arith.constant 0 : i32
    return %arg0, %c0_i32, %c0_i32_0 : i32, i32, i32
  }
}

</mosaic_0001>

<llo_original>
// kernel: tpu_custom_call.1
$region0: #{tpu_custom_call.1}
  #allocation0 [shape = 'u32[]', space=smem, size = 0x4, offset = 0x4, fixed_abs, tag = 'smem constant byte address 0x4 - core index']
  #allocation1 [shape = 'u32[144,128]{1,0:T(1,128)}', space=vmem, size = 0x12000, scoped, tag = 'internal scratch']
  %s0 = inlined_call_operand.vmem [shape: f32[10,8], index: 0, kind: input, shape index: {}]
  %s1 = inlined_call_operand.vmem [shape: s32[1,8], index: 1, kind: input, shape index: {}]
  %s2 = inlined_call_operand.hbm [shape: f32[1,1,8], index: 2, kind: output, shape index: {}]
  %s3 = sld [smem:[#allocation0]]
  $region34: #{tpu_custom_call.1} parent=0
    _
  %s5 = ssub.s32 1, %s3
  %s6 = scalar_select 0, %s5, %s3
  $region1: #{tpu_custom_call.1} parent=0
    #allocation2 [shape = 'u8[512]{0}', space=vmem, size = 0x400, scoped, tag = 'output window, operand 0, single buffered']
    #allocation3 [shape = 's32[1]{0}', space=sflag, size = 0x4, scoped, tag = 'scoped memory for tpu_custom_call.1']
    %7 = vsyncpa [#allocation3], 0
    // Predicated region
    $region2: #{tpu_custom_call.1} parent=1 // pred_check
      _
    $region3: #{tpu_custom_call.1} parent=1 // pred_check_branch
      %9 = sbr.rel (0) target = $region5
    $region4: #{tpu_custom_call.1} parent=1 // pred_region
      %s10 = sadd.s32 0, 0
      %p11 = scmp.lt.s32.totalorder %s10, 0
      %s12 = scalar_select %p11, %s10, 0
      %p13 = scmp.lt.s32.totalorder %s12, 0
      %s14 = scalar_select %p13, %s12, 0
      %s15 = smul.addr %s14, 8
      %s16 = scalar_lea.vmem %s0, %s15
      %s17 = sadd.s32 0, 0
      %p18 = scmp.lt.s32.totalorder %s17, 0
      %s19 = scalar_select %p18, %s17, 0
    $region5: #{tpu_custom_call.1} parent=1 // pred_fallthru
      _
    // Predicated region
    $region6: #{tpu_custom_call.1} parent=1 // pred_check
      _
    $region7: #{tpu_custom_call.1} parent=1 // pred_check_branch
      %21 = sbr.rel (0) target = $region9
    $region8: #{tpu_custom_call.1} parent=1 // pred_region
      %s22 = sadd.s32 0, 0
      %p23 = scmp.lt.s32.totalorder %s22, 0
      %s24 = scalar_select %p23, %s22, 0
      %p25 = scmp.lt.s32.totalorder %s24, 0
      %s26 = scalar_select %p25, %s24, 0
      %s27 = scalar_lea.vmem %s1, %s26
      %s28 = sadd.s32 0, 0
      %p29 = scmp.lt.s32.totalorder %s28, 0
      %s30 = scalar_select %p29, %s28, 0
    $region9: #{tpu_custom_call.1} parent=1 // pred_fallthru
      _
    %s31 = sadd.s32 0, 0
    %p32 = scmp.lt.s32.totalorder %s31, 0
    %s33 = scalar_select %p32, %s31, 0
    %p34 = scmp.lt.s32.totalorder %s33, 0
    %s35 = scalar_select %p34, %s33, 0
    %s36 = smul.addr %s35, 8
    %s37 = scalar_lea.vmem %s0, %s36
    %s38 = sadd.s32 0, 0
    %p39 = scmp.lt.s32.totalorder %s38, 0
    %s40 = scalar_select %p39, %s38, 0
    %p41 = scmp.lt.s32.totalorder %s40, 0
    %s42 = scalar_select %p41, %s40, 0
    %s43 = scalar_lea.vmem %s1, %s42
    %s44 = sadd.s32 0, 0
    %p45 = scmp.lt.s32.totalorder %s44, 0
    %s46 = scalar_select %p45, %s44, 0
    %p47 = scmp.lt.s32.totalorder %s46, 0
    %s48 = scalar_select %p47, %s46, 0
    %s49 = smul.addr %s48, 8
    %s50 = scalar_lea.vmem %s0, %s49
    %s51 = sadd.s32 0, 0
    %p52 = scmp.lt.s32.totalorder %s51, 0
    %s53 = scalar_select %p52, %s51, 0
    %s54 = sadd.s32 0, 0
    %p55 = scmp.lt.s32.totalorder %s54, 0
    %s56 = scalar_select %p55, %s54, 0
    %p57 = scmp.lt.s32.totalorder %s56, 0
    %s58 = scalar_select %p57, %s56, 0
    %s59 = scalar_lea.vmem %s1, %s58
    %s60 = sadd.s32 0, 0
    %p61 = scmp.lt.s32.totalorder %s60, 0
    %s62 = scalar_select %p61, %s60, 0
    %p63 = scmp.eq.s32.totalorder 0, 0
    // Predicated region
    $region10: #{tpu_custom_call.1} parent=1 // pred_check
      %p64 = pneg %p63
    $region11: #{tpu_custom_call.1} parent=1 // pred_check_branch
      %66 = sbr.rel (%p64) target = $region13
    $region12: #{tpu_custom_call.1} parent=1 // pred_region
      %vm67 = vcmask 57344
      %68 = vst.msk [vmem:[#allocation2] sm:$0x1] %vm67, 0.0
    $region13: #{tpu_custom_call.1} parent=1 // pred_fallthru
      _
    %s69 = sadd.s32 0, 0
    %s70 = smul.u32 %s69, 8
    %p71 = scmp.lt.s32.totalorder %s70, 8
    // Predicated region
    $region14: #{tpu_custom_call.1} parent=1 // pred_check
      %p72 = pneg %p71
    $region15: #{tpu_custom_call.1} parent=1 // pred_check_branch
      %74 = sbr.rel (%p72) target = $region17
    $region16: #{tpu_custom_call.1} parent=1 // pred_region
      %v75 = vld [vmem:[%s50] sm:$0xff]
      %v76 = vld [vmem:[%s50 + $0x8] sm:$0x3]
      %v77 = vld [vmem:[%s59] sm:$0x1]
      %v78 = vlaneseq
      %v79 = vshrl.u32 %v78, 7
      %v80 = vadd.s32 %v79, 8
      %v81 = vlaneseq
      %v82 = vshrl.u32 %v81, 7
      %v83 = vsub.s32 0, %v82
      %v84 = vrot.slane %v77, %v83
      %vm85 = vcmp.eq.s32.totalorder %v79, %v84
      %vm86 = vcmp.eq.s32.totalorder %v80, %v84
      %vm87 = vcmask 64512
      %v88 = vsel %vm87, %v75, -inf
      %vm89 = vcmask 58368
      %v90 = vsel %vm89, %v76, -inf
      %v91 = vmax.f32 %v88, %v90
      %v92 = vrot.slane %v91, 4
      %v93 = vmax.f32 %v91, %v92
      %v94 = vrot.slane %v93, 2
      %v95 = vmax.f32 %v93, %v94
      %v96 = vrot.slane %v95, 1
      %v97 = vmax.f32 %v95, %v96
      %v98 = vsub.f32 %v75, %v97
      %v99 = vsub.f32 %v76, %v97
      %v100 = vmul.f32 %v98, 1.442695
      %v101 = vpow.pop %v100
      %v102 = vmul.f32 %v99, 1.442695
      %v103 = vpow.pop %v102
      %v104 = vsel %vm87, %v101, 0.0
      %v105 = vsel %vm89, %v103, 0.0
      %v106 = vadd.f32 %v104, %v105
      %v107 = vrot.slane %v106, 4
      %v108 = vadd.f32 %v106, %v107
      %v109 = vrot.slane %v108, 2
      %v110 = vadd.f32 %v108, %v109
      %v111 = vrot.slane %v110, 1
      %v112 = vadd.f32 %v110, %v111
      %v113 = vlog2.pop %v112
      %v114 = vmul.f32 %v113, 0.6931472
      %v115 = vsel %vm85, %v98, 0.0
      %v116 = vsel %vm86, %v99, 0.0
      %v117 = vsel %vm87, %v115, 0.0
      %v118 = vsel %vm89, %v116, 0.0
      %v119 = vadd.f32 %v117, %v118
      %v120 = vrot.slane %v119, 4
      %v121 = vadd.f32 %v119, %v120
      %v122 = vrot.slane %v121, 2
      %v123 = vadd.f32 %v121, %v122
      %v124 = vrot.slane %v123, 1
      %v125 = vadd.f32 %v123, %v124
      %v126 = vsub.f32 %v114, %v125
      %v127 = vrcp.pop %v112
      %v128 = vmul.f32 %v101, %v127
      %v129 = vmul.f32 %v103, %v127
      %v130 = vmax.f32 %v128, 1e-07
      %v131 = vmax.f32 %v129, 1e-07
      %v132 = vsel %vm87, %v130, 0.0
      %v133 = vsel %vm89, %v131, 0.0
      %v134 = vadd.f32 %v132, %v133
      %v135 = vrot.slane %v134, 4
      %v136 = vadd.f32 %v134, %v135
      %v137 = vrot.slane %v136, 2
      %v138 = vadd.f32 %v136, %v137
      %v139 = vrot.slane %v138, 1
      %v140 = vadd.f32 %v138, %v139
      %v141 = vmul.f32 %v125, 1.442695
      %v142 = vpow.pop %v141
      %v143 = vmul.f32 %v142, %v127
      %v144 = vmax.f32 %v143, 1e-07
      %v145 = vsub.f32 %v140, %v144
      %v146 = vmul.f32 %v145, 9.2103405
      %v147 = vmul.f32 %v126, 0.1
      %v148 = vadd.f32 %v147, %v146
      %s149 = sadd.s32 %s70, 8
      %p150 = scmp.le.s32.totalorder %s149, 8
      // Predicated region
      $region18: #{tpu_custom_call.1} parent=16 // pred_check
        %p151 = pneg %p150
      $region19: #{tpu_custom_call.1} parent=16 // pred_check_branch
        %153 = sbr.rel (%p151) target = $region21
      $region20: #{tpu_custom_call.1} parent=16 // pred_region
        %v154 = vld [vmem:[#allocation2] sm:$0x1]
        %v155 = vadd.f32 %v154, %v148
        %vm156 = vcmask 57344
        %157 = vst.msk [vmem:[#allocation2] sm:$0x1] %vm156, %v155
      $region21: #{tpu_custom_call.1} parent=16 // pred_fallthru
        _
      %p158 = scmp.gt.s32.totalorder %s149, 8
      // Predicated region
      $region22: #{tpu_custom_call.1} parent=16 // pred_check
        %p159 = pneg %p158
      $region23: #{tpu_custom_call.1} parent=16 // pred_check_branch
        %161 = sbr.rel (%p159) target = $region25
      $region24: #{tpu_custom_call.1} parent=16 // pred_region
        %v162 = vlaneseq
        %v163 = vand.u32 %v162, 127
        %s164 = ssub.s32 8, %s70
        %v165 = vstv %s164
        %vm166 = vcmp.lt.s32.totalorder %v163, %v165
        %v167 = vsel %vm166, %v148, 0.0
        %v168 = vld [vmem:[#allocation2] sm:$0x1]
        %v169 = vadd.f32 %v168, %v167
        %vm170 = vcmask 57344
        %171 = vst.msk [vmem:[#allocation2] sm:$0x1] %vm170, %v169
      $region25: #{tpu_custom_call.1} parent=16 // pred_fallthru
        _
    $region17: #{tpu_custom_call.1} parent=1 // pred_fallthru
      _
    // Predicated region
    $region26: #{tpu_custom_call.1} parent=1 // pred_check
      _
    $region27: #{tpu_custom_call.1} parent=1 // pred_check_branch
      %173 = sbr.rel (0) target = $region29
    $region28: #{tpu_custom_call.1} parent=1 // pred_region
      %s175 = ssub.s32 16, 16
      %176 = vsyncadd [#allocation3], %s175
      %s178 = sshll.u32 [#allocation2], 4
      %s179 = int_to_ptr.vmem [resolvable:$true] %s178
      %181 = dma.vmem_to_hbm [thread:$0]  %s179, 16, %s2, [#allocation3]
    $region29: #{tpu_custom_call.1} parent=1 // pred_fallthru
      _
    // Predicated region
    $region30: #{tpu_custom_call.1} parent=1 // pred_check
      _
    $region31: #{tpu_custom_call.1} parent=1 // pred_check_branch
      %183 = sbr.rel (0) target = $region33
    $region32: #{tpu_custom_call.1} parent=1 // pred_region
      %184 = dma.done [#allocation3], 16
    $region33: #{tpu_custom_call.1} parent=1 // pred_fallthru
      _
    %185 = vsyncpa [#allocation3], 1

</llo_original>
